<compile_context>
chip_gen: v6e
topology: v6e:2x2x1
jax: 0.10.0
libtpu: 0.0.40
codegen_flags: <defaults>
</compile_context>

<pallas_src>
import functools

import jax
import jax.numpy as jnp
from jax.experimental import pallas as pl
from jax.experimental.pallas import tpu as pltpu

LRELU_SLOPE = 0.1
_HALO = 128  # lane-aligned halo block width; must be >= pad1 + pad2


def get_padding(kernel_size, dilation=1):
    return int((kernel_size * dilation - dilation) / 2)


def _resblock2_kernel(xl_ref, xc_ref, xr_ref, w1_ref, b1_ref, w2_ref, b2_ref,
                      o_ref, *, K, d1, d2, t_tile, t_true, compute_dtype):
    """Fused ResBlock2 over one (batch, time-tile) block.

    xl/xc/xr : (1, C, 128) / (1, C, t_tile) / (1, C, 128) halo'd input pieces
    w*_ref   : (K, C, C)  per-tap weights, w[k] == conv_weight[:, :, k]
    b*_ref   : (C, 1)     biases
    o_ref    : (1, C, t_tile) output tile
    """
    hb = _HALO
    pad1 = get_padding(K, d1)
    pad2 = get_padding(K, d2)
    C = xc_ref.shape[1]
    W = t_tile + 2 * hb          # halo'd frame width
    W1 = t_tile + 2 * pad2       # stage-1 output region: tile +/- pad2

    t0 = pl.program_id(1) * t_tile          # global start of this tile

    # Halo'd input frame covering global positions [t0 - hb, t0 + t_tile + hb).
    x_frame = jnp.concatenate(
        [xl_ref[0], xc_ref[0], xr_ref[0]], axis=-1).astype(jnp.float32)

    # Zero every frame column outside the real sequence [0, t_true): handles
    # sequence edges, clamped neighbour blocks and tail lane-padding uniformly,
    # and exactly reproduces Conv1d zero "same" padding (leaky_relu(0) == 0).
    pos_f = jax.lax.broadcasted_iota(jnp.int32, (C, W), 1) + (t0 - hb)
    x_frame = jnp.where((pos_f >= 0) & (pos_f < t_true), x_frame, 0.0)

    def dilated_conv(xt, w_ref, d, start0, width):
        # K accumulating (C,C)@(C,width) MXU matmuls; the K dilated shifts are
        # small static lane-offset slices of the assembled frame (no stacked
        # (K*C, T) operand, no per-tap pad concatenates).
        acc = None
        for k in range(K):
            xs = xt[:, start0 + k * d: start0 + k * d + width]
            p = jnp.dot(w_ref[k], xs, preferred_element_type=jnp.float32)
            acc = p if acc is None else acc + p
        return acc

    # ---- stage 1: y1 = conv_d1(leaky_relu(x)) + b1 + x   over tile +/- pad2 ----
    xt1 = jnp.where(x_frame >= 0.0, x_frame, LRELU_SLOPE * x_frame)
    xt1 = xt1.astype(compute_dtype)                       # bf16 MXU operand
    acc1 = dilated_conv(xt1, w1_ref, d1, hb - pad2 - pad1, W1)
    x_r1 = x_frame[:, hb - pad2: hb - pad2 + W1]
    y1 = acc1 + b1_ref[...] + x_r1                        # (C, W1) f32

    # ---- stage 2: y2 = conv_d2(leaky_relu(y1)) + b2 + y1   over the tile ----
    # Stage-2 input must be zero outside [0, t_true) (PyTorch pads the real
    # activation, never the recomputed halo), so mask before the conv.
    pos_r1 = jax.lax.broadcasted_iota(jnp.int32, (C, W1), 1) + (t0 - pad2)
    xt2 = jnp.where((pos_r1 >= 0) & (pos_r1 < t_true),
                    jnp.where(y1 >= 0.0, y1, LRELU_SLOPE * y1), 0.0)
    xt2 = xt2.astype(compute_dtype)                       # bf16 MXU operand
    acc2 = dilated_conv(xt2, w2_ref, d2, 0, t_tile)
    y2 = acc2 + b2_ref[...] + y1[:, pad2: pad2 + t_tile]

    o_ref[0] = y2.astype(o_ref.dtype)


def _choose_t_tile(t_pad, t_tile_max):
    """Largest multiple of 128 that divides t_pad and is <= t_tile_max."""
    best, m = 128, 128
    cap = max(128, min(t_pad, t_tile_max))
    while m <= cap:
        if t_pad % m == 0:
            best = m
        m += 128
    return best


def _vmem_limit_bytes(C, t_tile, K):
    """Scoped-VMEM request from actual block + live-buffer sizes (capped for v7x)."""
    w = t_tile + 2 * _HALO
    # double-buffered pipeline blocks: x tile + 2 halo blocks + output tile (f32)
    blocks = 2 * C * w * 4 + 2 * C * t_tile * 4
    # weights (bf16) + biases (f32) for both stages, double-buffered
    blocks += 2 * 2 * (K * C * C * 2 + C * 4)
    # live in-kernel values: f32 frame + mask work, bf16 activations, f32 accs/y1/y2
    live = C * w * (2 * 4 + 2 * 2) + 4 * C * w * 4
    est = int((blocks + live) * 1.5)
    return int(min(56 * 2 ** 20, max(32 * 2 ** 20, est)))


def resblock2_forward(x, w1, b1, w2, b2, *, kernel_size, dilation,
                      t_tile_max=1024, compute_dtype=jnp.bfloat16):
    """x: (B, C, T).  w*: (K, C, C) per-tap weights.  b*: (C, 1) biases."""
    B, C, T = x.shape
    K = kernel_size
    d1, d2 = dilation
    assert K % 2 == 1, "symmetric 'same' padding assumes odd kernel_size"
    pad1, pad2 = get_padding(K, d1), get_padding(K, d2)
    assert pad1 + pad2 <= _HALO, "dilation too large for the 128-column halo"

    # Round T up to a lane multiple; the extra tail columns are masked in-kernel
    # against the true length, so results are exact for any T.
    t_pad = ((T + 127) // 128) * 128
    x_p = x if t_pad == T else jnp.pad(x, ((0, 0), (0, 0), (0, t_pad - T)))
    t_tile = _choose_t_tile(t_pad, t_tile_max)
    n_t = t_pad // t_tile
    r = t_tile // _HALO                  # halo-sized blocks per tile
    nhb = t_pad // _HALO                 # total halo-sized blocks along time

    kern = functools.partial(_resblock2_kernel, K=K, d1=d1, d2=d2,
                             t_tile=t_tile, t_true=T,
                             compute_dtype=compute_dtype)

    out = pl.pallas_call(
        kern,
        out_shape=jax.ShapeDtypeStruct((B, C, t_pad), x.dtype),
        grid_spec=pltpu.PrefetchScalarGridSpec(
            num_scalar_prefetch=0,
            grid=(B, n_t),
            in_specs=[
                # left halo block (clamped at the start; masked in-kernel)
                pl.BlockSpec((1, C, _HALO),
                             lambda b, t: (b, 0, jnp.maximum(t * r - 1, 0))),
                # the tile itself
                pl.BlockSpec((1, C, t_tile), lambda b, t: (b, 0, t)),
                # right halo block (clamped at the end; masked in-kernel)
                pl.BlockSpec((1, C, _HALO),
                             lambda b, t: (b, 0, jnp.minimum((t + 1) * r, nhb - 1))),
                # constant weight/bias blocks.  (pipeline_mode=pl.Buffered(1)
                # would single-buffer these for extra VMEM headroom at C~512.)
                pl.BlockSpec((K, C, C), lambda b, t: (0, 0, 0)),
                pl.BlockSpec((C, 1), lambda b, t: (0, 0)),
                pl.BlockSpec((K, C, C), lambda b, t: (0, 0, 0)),
                pl.BlockSpec((C, 1), lambda b, t: (0, 0)),
            ],
            out_specs=pl.BlockSpec((1, C, t_tile), lambda b, t: (b, 0, t)),
        ),
        compiler_params=pltpu.CompilerParams(
            dimension_semantics=("parallel", "parallel"),
            vmem_limit_bytes=_vmem_limit_bytes(C, t_tile, K),
        ),
    )(x_p, x_p, x_p, w1, b1, w2, b2)

    return out if t_pad == T else out[:, :, :T]


class ResBlock2Pallas:
    """Deterministic synthetic parameters matching PyTorch ResBlock2 shapes."""

    def __init__(self, channels, kernel_size, dilation, key,
                 compute_dtype=jnp.bfloat16):
        assert len(dilation) == 2, "ResBlock2 has exactly two convs"
        assert kernel_size % 2 == 1
        self.channels = channels
        self.kernel_size = kernel_size
        self.dilation = tuple(dilation)
        self.compute_dtype = compute_dtype
        C, K = channels, kernel_size

        self.weights = []      # (C, C, K)  f32 original layout (for the reference)
        self.biases = []       # (C,)       f32
        self.tap_weights = []  # (K, C, C)  compute_dtype, tap-major for the kernel
        self.col_biases = []   # (C, 1)     f32

        for _d in self.dilation:
            kv, kb, key = jax.random.split(key, 3)
            # init_weights: weight ~ N(0, 0.01).  weight_norm with its default
            # g = ||v|| reproduces w == v exactly, so the effective conv weight
            # is v (remove_weight_norm would be a no-op here).
            w = 0.01 * jax.random.normal(kv, (C, C, K), dtype=jnp.float32)
            # Conv1d default bias init: U(-bound, bound), bound = 1/sqrt(fan_in).
            bound = 1.0 / jnp.sqrt(jnp.float32(C * K))
            bias = jax.random.uniform(kb, (C,), dtype=jnp.float32,
                                      minval=-bound, maxval=bound)
            self.weights.append(w)
            self.biases.append(bias)
            self.tap_weights.append(
                jnp.transpose(w, (2, 0, 1)).astype(compute_dtype))
            self.col_biases.append(bias.reshape(C, 1))

    def __call__(self, x):
        return resblock2_forward(
            x,
            self.tap_weights[0], self.col_biases[0],
            self.tap_weights[1], self.col_biases[1],
            kernel_size=self.kernel_size, dilation=self.dilation,
            compute_dtype=self.compute_dtype)


def _reference_forward(block, x):
    """Pure-JAX (f32, HIGHEST precision) reference for a sanity check."""
    for w, b, d in zip(block.weights, block.biases, block.dilation):
        xt = jnp.where(x >= 0, x, LRELU_SLOPE * x)
        pad = get_padding(block.kernel_size, d)
        y = jax.lax.conv_general_dilated(
            xt, w, window_strides=(1,), padding=[(pad, pad)],
            rhs_dilation=(d,), dimension_numbers=("NCH", "OIH", "NCH"),
            precision=jax.lax.Precision.HIGHEST)
        y = y + b.reshape(1, -1, 1)
        x = y + x
    return x


if __name__ == "__main__":
    key = jax.random.PRNGKey(0)
    kx, kp = jax.random.split(key)

    B, C, T = 2, 8, 128
    kernel_size = 3
    dilation = (1, 3)

    x = jax.random.normal(kx, (B, C, T), dtype=jnp.float32)

    block = ResBlock2Pallas(C, kernel_size, dilation, kp)

    out = jax.block_until_ready(block(x))

    ref = _reference_forward(block, x)
    assert out.shape == (B, C, T)
    err = float(jnp.max(jnp.abs(out - ref)))
    # bf16 MXU operands -> ~1e-3-scale deviation from the f32 reference.
    assert jnp.allclose(out, ref, atol=1e-2, rtol=1e-2), err

    print("KERNEL_OK")
</pallas_src>

<mosaic_0001>
module attributes {stable_mosaic.version = 11 : i64} {
  func.func @_resblock2_kernel(%arg0: i32, %arg1: i32, %arg2: memref<1x8x128xf32, #tpu.memory_space<vmem>>, %arg3: memref<1x8x128xf32, #tpu.memory_space<vmem>>, %arg4: memref<1x8x128xf32, #tpu.memory_space<vmem>>, %arg5: memref<3x8x8xbf16, #tpu.memory_space<vmem>>, %arg6: memref<8x1xf32, #tpu.memory_space<vmem>>, %arg7: memref<3x8x8xbf16, #tpu.memory_space<vmem>>, %arg8: memref<8x1xf32, #tpu.memory_space<vmem>>, %arg9: memref<1x8x128xf32, #tpu.memory_space<vmem>>) attributes {dimension_semantics = [#tpu.dimension_semantics<parallel>, #tpu.dimension_semantics<parallel>], iteration_bounds = array<i64: 2, 1>, scalar_prefetch = 0 : i64, scratch_operands = 0 : i64, tpu.core_type = #tpu.core_type<tc>, window_params = [{transform_indices = @transform_0, window_bounds = array<i64: 1, 8, 128>}, {transform_indices = @transform_1, window_bounds = array<i64: 1, 8, 128>}, {transform_indices = @transform_2, window_bounds = array<i64: 1, 8, 128>}, {pipeline_mode = #tpu.pipeline_mode<synchronous>, transform_indices = @transform_3, window_bounds = array<i64: 3, 8, 8>}, {pipeline_mode = #tpu.pipeline_mode<synchronous>, transform_indices = @transform_4, window_bounds = array<i64: 8, 1>}, {pipeline_mode = #tpu.pipeline_mode<synchronous>, transform_indices = @transform_5, window_bounds = array<i64: 3, 8, 8>}, {pipeline_mode = #tpu.pipeline_mode<synchronous>, transform_indices = @transform_6, window_bounds = array<i64: 8, 1>}, {transform_indices = @transform_7, window_bounds = array<i64: 1, 8, 128>}]} {
    %c128_i32 = arith.constant 128 : i32
    %0 = arith.muli %arg1, %c128_i32 : i32
    %c0 = arith.constant 0 : index
    %c0_0 = arith.constant 0 : index
    %c0_1 = arith.constant 0 : index
    %1 = vector.load %arg2[%c0, %c0_0, %c0_1] : memref<1x8x128xf32, #tpu.memory_space<vmem>>, vector<1x8x128xf32>
    %2 = vector.shape_cast %1 : vector<1x8x128xf32> to vector<8x128xf32>
    %c0_2 = arith.constant 0 : index
    %c0_3 = arith.constant 0 : index
    %c0_4 = arith.constant 0 : index
    %3 = vector.load %arg3[%c0_2, %c0_3, %c0_4] : memref<1x8x128xf32, #tpu.memory_space<vmem>>, vector<1x8x128xf32>
    %4 = vector.shape_cast %3 : vector<1x8x128xf32> to vector<8x128xf32>
    %c0_5 = arith.constant 0 : index
    %c0_6 = arith.constant 0 : index
    %c0_7 = arith.constant 0 : index
    %5 = vector.load %arg4[%c0_5, %c0_6, %c0_7] : memref<1x8x128xf32, #tpu.memory_space<vmem>>, vector<1x8x128xf32>
    %6 = vector.shape_cast %5 : vector<1x8x128xf32> to vector<8x128xf32>
    %7 = tpu.concatenate %2, %4, %6 in 1 : vector<8x128xf32>, vector<8x128xf32>, vector<8x128xf32> -> vector<8x384xf32>
    %8 = tpu.iota {dimensions = array<i32: 1>} : vector<8x384xi32>
    %c128_i32_8 = arith.constant 128 : i32
    %9 = arith.subi %0, %c128_i32_8 : i32
    %10 = vector.broadcast %9 : i32 to vector<8x384xi32>
    %11 = arith.addi %8, %10 : vector<8x384xi32>
    %c0_i32 = arith.constant 0 : i32
    %12 = vector.broadcast %c0_i32 : i32 to vector<8x384xi32>
    %13 = arith.cmpi sge, %11, %12 : vector<8x384xi32>
    %c128_i32_9 = arith.constant 128 : i32
    %14 = vector.broadcast %c128_i32_9 : i32 to vector<8x384xi32>
    %15 = arith.cmpi slt, %11, %14 : vector<8x384xi32>
    %16 = arith.andi %13, %15 : vector<8x384xi1>
    %cst = arith.constant 0.000000e+00 : f32
    %17 = vector.broadcast %cst : f32 to vector<8x384xf32>
    %18 = arith.select %16, %7, %17 : vector<8x384xi1>, vector<8x384xf32>
    %cst_10 = arith.constant 0.000000e+00 : f32
    %19 = vector.broadcast %cst_10 : f32 to vector<8x384xf32>
    %20 = arith.cmpf oge, %18, %19 : vector<8x384xf32>
    %cst_11 = arith.constant 1.000000e-01 : f32
    %21 = vector.broadcast %cst_11 : f32 to vector<8x384xf32>
    %22 = arith.mulf %21, %18 : vector<8x384xf32>
    %23 = arith.select %20, %18, %22 : vector<8x384xi1>, vector<8x384xf32>
    %24 = arith.truncf %23 : vector<8x384xf32> to vector<8x384xbf16>
    %25 = vector.extract_strided_slice %24 {offsets = [0, 124], sizes = [8, 134], strides = [1, 1]} : vector<8x384xbf16> to vector<8x134xbf16>
    %c0_12 = arith.constant 0 : index
    %c0_13 = arith.constant 0 : index
    %c0_14 = arith.constant 0 : index
    %26 = vector.load %arg5[%c0_12, %c0_13, %c0_14] : memref<3x8x8xbf16, #tpu.memory_space<vmem>>, vector<1x8x8xbf16>
    %27 = vector.shape_cast %26 : vector<1x8x8xbf16> to vector<8x8xbf16>
    %cst_15 = arith.constant dense<0.000000e+00> : vector<8x134xf32>
    %28 = tpu.matmul %27, %25, %cst_15 {dimension_numbers = #tpu.dot_dimension_numbers<[1], [0], [0], [1], [0, 0, 1, 1], [], []>} : vector<8x8xbf16>, vector<8x134xbf16>, vector<8x134xf32> -> vector<8x134xf32>
    %29 = vector.extract_strided_slice %24 {offsets = [0, 125], sizes = [8, 134], strides = [1, 1]} : vector<8x384xbf16> to vector<8x134xbf16>
    %c1 = arith.constant 1 : index
    %c0_16 = arith.constant 0 : index
    %c0_17 = arith.constant 0 : index
    %30 = vector.load %arg5[%c1, %c0_16, %c0_17] : memref<3x8x8xbf16, #tpu.memory_space<vmem>>, vector<1x8x8xbf16>
    %31 = vector.shape_cast %30 : vector<1x8x8xbf16> to vector<8x8xbf16>
    %cst_18 = arith.constant dense<0.000000e+00> : vector<8x134xf32>
    %32 = tpu.matmul %31, %29, %cst_18 {dimension_numbers = #tpu.dot_dimension_numbers<[1], [0], [0], [1], [0, 0, 1, 1], [], []>} : vector<8x8xbf16>, vector<8x134xbf16>, vector<8x134xf32> -> vector<8x134xf32>
    %33 = arith.addf %28, %32 : vector<8x134xf32>
    %34 = vector.extract_strided_slice %24 {offsets = [0, 126], sizes = [8, 134], strides = [1, 1]} : vector<8x384xbf16> to vector<8x134xbf16>
    %c2 = arith.constant 2 : index
    %c0_19 = arith.constant 0 : index
    %c0_20 = arith.constant 0 : index
    %35 = vector.load %arg5[%c2, %c0_19, %c0_20] : memref<3x8x8xbf16, #tpu.memory_space<vmem>>, vector<1x8x8xbf16>
    %36 = vector.shape_cast %35 : vector<1x8x8xbf16> to vector<8x8xbf16>
    %cst_21 = arith.constant dense<0.000000e+00> : vector<8x134xf32>
    %37 = tpu.matmul %36, %34, %cst_21 {dimension_numbers = #tpu.dot_dimension_numbers<[1], [0], [0], [1], [0, 0, 1, 1], [], []>} : vector<8x8xbf16>, vector<8x134xbf16>, vector<8x134xf32> -> vector<8x134xf32>
    %38 = arith.addf %33, %37 : vector<8x134xf32>
    %39 = vector.extract_strided_slice %18 {offsets = [0, 125], sizes = [8, 134], strides = [1, 1]} : vector<8x384xf32> to vector<8x134xf32>
    %c0_22 = arith.constant 0 : index
    %c0_23 = arith.constant 0 : index
    %40 = vector.load %arg6[%c0_22, %c0_23] : memref<8x1xf32, #tpu.memory_space<vmem>>, vector<8x1xf32>
    %41 = vector.broadcast %40 : vector<8x1xf32> to vector<8x134xf32>
    %42 = arith.addf %38, %41 : vector<8x134xf32>
    %43 = arith.addf %42, %39 : vector<8x134xf32>
    %44 = tpu.iota {dimensions = array<i32: 1>} : vector<8x134xi32>
    %c3_i32 = arith.constant 3 : i32
    %45 = arith.subi %0, %c3_i32 : i32
    %46 = vector.broadcast %45 : i32 to vector<8x134xi32>
    %47 = arith.addi %44, %46 : vector<8x134xi32>
    %c0_i32_24 = arith.constant 0 : i32
    %48 = vector.broadcast %c0_i32_24 : i32 to vector<8x134xi32>
    %49 = arith.cmpi sge, %47, %48 : vector<8x134xi32>
    %c128_i32_25 = arith.constant 128 : i32
    %50 = vector.broadcast %c128_i32_25 : i32 to vector<8x134xi32>
    %51 = arith.cmpi slt, %47, %50 : vector<8x134xi32>
    %52 = arith.andi %49, %51 : vector<8x134xi1>
    %cst_26 = arith.constant 0.000000e+00 : f32
    %53 = vector.broadcast %cst_26 : f32 to vector<8x134xf32>
    %54 = arith.cmpf oge, %43, %53 : vector<8x134xf32>
    %cst_27 = arith.constant 1.000000e-01 : f32
    %55 = vector.broadcast %cst_27 : f32 to vector<8x134xf32>
    %56 = arith.mulf %55, %43 : vector<8x134xf32>
    %57 = arith.select %54, %43, %56 : vector<8x134xi1>, vector<8x134xf32>
    %cst_28 = arith.constant 0.000000e+00 : f32
    %58 = vector.broadcast %cst_28 : f32 to vector<8x134xf32>
    %59 = arith.select %52, %57, %58 : vector<8x134xi1>, vector<8x134xf32>
    %60 = arith.truncf %59 : vector<8x134xf32> to vector<8x134xbf16>
    %61 = vector.extract_strided_slice %60 {offsets = [0, 0], sizes = [8, 128], strides = [1, 1]} : vector<8x134xbf16> to vector<8x128xbf16>
    %c0_29 = arith.constant 0 : index
    %c0_30 = arith.constant 0 : index
    %c0_31 = arith.constant 0 : index
    %62 = vector.load %arg7[%c0_29, %c0_30, %c0_31] : memref<3x8x8xbf16, #tpu.memory_space<vmem>>, vector<1x8x8xbf16>
    %63 = vector.shape_cast %62 : vector<1x8x8xbf16> to vector<8x8xbf16>
    %cst_32 = arith.constant dense<0.000000e+00> : vector<8x128xf32>
    %64 = tpu.matmul %63, %61, %cst_32 {dimension_numbers = #tpu.dot_dimension_numbers<[1], [0], [0], [1], [0, 0, 1, 1], [], []>} : vector<8x8xbf16>, vector<8x128xbf16>, vector<8x128xf32> -> vector<8x128xf32>
    %65 = vector.extract_strided_slice %60 {offsets = [0, 3], sizes = [8, 128], strides = [1, 1]} : vector<8x134xbf16> to vector<8x128xbf16>
    %c1_33 = arith.constant 1 : index
    %c0_34 = arith.constant 0 : index
    %c0_35 = arith.constant 0 : index
    %66 = vector.load %arg7[%c1_33, %c0_34, %c0_35] : memref<3x8x8xbf16, #tpu.memory_space<vmem>>, vector<1x8x8xbf16>
    %67 = vector.shape_cast %66 : vector<1x8x8xbf16> to vector<8x8xbf16>
    %cst_36 = arith.constant dense<0.000000e+00> : vector<8x128xf32>
    %68 = tpu.matmul %67, %65, %cst_36 {dimension_numbers = #tpu.dot_dimension_numbers<[1], [0], [0], [1], [0, 0, 1, 1], [], []>} : vector<8x8xbf16>, vector<8x128xbf16>, vector<8x128xf32> -> vector<8x128xf32>
    %69 = arith.addf %64, %68 : vector<8x128xf32>
    %70 = vector.extract_strided_slice %60 {offsets = [0, 6], sizes = [8, 128], strides = [1, 1]} : vector<8x134xbf16> to vector<8x128xbf16>
    %c2_37 = arith.constant 2 : index
    %c0_38 = arith.constant 0 : index
    %c0_39 = arith.constant 0 : index
    %71 = vector.load %arg7[%c2_37, %c0_38, %c0_39] : memref<3x8x8xbf16, #tpu.memory_space<vmem>>, vector<1x8x8xbf16>
    %72 = vector.shape_cast %71 : vector<1x8x8xbf16> to vector<8x8xbf16>
    %cst_40 = arith.constant dense<0.000000e+00> : vector<8x128xf32>
    %73 = tpu.matmul %72, %70, %cst_40 {dimension_numbers = #tpu.dot_dimension_numbers<[1], [0], [0], [1], [0, 0, 1, 1], [], []>} : vector<8x8xbf16>, vector<8x128xbf16>, vector<8x128xf32> -> vector<8x128xf32>
    %74 = arith.addf %69, %73 : vector<8x128xf32>
    %c0_41 = arith.constant 0 : index
    %c0_42 = arith.constant 0 : index
    %75 = vector.load %arg8[%c0_41, %c0_42] : memref<8x1xf32, #tpu.memory_space<vmem>>, vector<8x1xf32>
    %76 = vector.broadcast %75 : vector<8x1xf32> to vector<8x128xf32>
    %77 = arith.addf %74, %76 : vector<8x128xf32>
    %78 = vector.extract_strided_slice %43 {offsets = [0, 3], sizes = [8, 128], strides = [1, 1]} : vector<8x134xf32> to vector<8x128xf32>
    %79 = arith.addf %77, %78 : vector<8x128xf32>
    %c0_43 = arith.constant 0 : index
    %c0_44 = arith.constant 0 : index
    %c0_45 = arith.constant 0 : index
    %80 = vector.load %arg9[%c0_43, %c0_44, %c0_45] : memref<1x8x128xf32, #tpu.memory_space<vmem>>, vector<1x8x128xf32>
    %81 = vector.shape_cast %80 : vector<1x8x128xf32> to vector<8x128xf32>
    %82 = vector.shape_cast %79 : vector<8x128xf32> to vector<1x8x128xf32>
    tpu.vector_store %arg9[%c0_43, %c0_44, %c0_45], %82 {strides = array<i32>} : memref<1x8x128xf32, #tpu.memory_space<vmem>>, vector<1x8x128xf32>,
    return
  }
  func.func @transform_0(%arg0: i32, %arg1: i32) -> (i32, i32, i32) {
    %c1_i32 = arith.constant 1 : i32
    %0 = arith.muli %arg1, %c1_i32 : i32
    %c1_i32_0 = arith.constant 1 : i32
    %1 = arith.subi %0, %c1_i32_0 : i32
    %c0_i32 = arith.constant 0 : i32
    %2 = arith.maxsi %1, %c0_i32 : i32
    %c0_i32_1 = arith.constant 0 : i32
    %c0_i32_2 = arith.constant 0 : i32
    return %arg0, %c0_i32_1, %2 : i32, i32, i32
  }
  func.func @transform_1(%arg0: i32, %arg1: i32) -> (i32, i32, i32) {
    %c0_i32 = arith.constant 0 : i32
    %c0_i32_0 = arith.constant 0 : i32
    return %arg0, %c0_i32, %arg1 : i32, i32, i32
  }
  func.func @transform_2(%arg0: i32, %arg1: i32) -> (i32, i32, i32) {
    %c1_i32 = arith.constant 1 : i32
    %0 = arith.addi %arg1, %c1_i32 : i32
    %c1_i32_0 = arith.constant 1 : i32
    %1 = arith.muli %0, %c1_i32_0 : i32
    %c0_i32 = arith.constant 0 : i32
    %2 = arith.minsi %1, %c0_i32 : i32
    %c0_i32_1 = arith.constant 0 : i32
    %c0_i32_2 = arith.constant 0 : i32
    return %arg0, %c0_i32_1, %2 : i32, i32, i32
  }
  func.func @transform_3(%arg0: i32, %arg1: i32) -> (i32, i32, i32) {
    %c0_i32 = arith.constant 0 : i32
    %c0_i32_0 = arith.constant 0 : i32
    %c0_i32_1 = arith.constant 0 : i32
    %c0_i32_2 = arith.constant 0 : i32
    return %c0_i32, %c0_i32_0, %c0_i32_1 : i32, i32, i32
  }
  func.func @transform_4(%arg0: i32, %arg1: i32) -> (i32, i32) {
    %c0_i32 = arith.constant 0 : i32
    %c0_i32_0 = arith.constant 0 : i32
    %c0_i32_1 = arith.constant 0 : i32
    return %c0_i32, %c0_i32_0 : i32, i32
  }
  func.func @transform_5(%arg0: i32, %arg1: i32) -> (i32, i32, i32) {
    %c0_i32 = arith.constant 0 : i32
    %c0_i32_0 = arith.constant 0 : i32
    %c0_i32_1 = arith.constant 0 : i32
    %c0_i32_2 = arith.constant 0 : i32
    return %c0_i32, %c0_i32_0, %c0_i32_1 : i32, i32, i32
  }
  func.func @transform_6(%arg0: i32, %arg1: i32) -> (i32, i32) {
    %c0_i32 = arith.constant 0 : i32
    %c0_i32_0 = arith.constant 0 : i32
    %c0_i32_1 = arith.constant 0 : i32
    return %c0_i32, %c0_i32_0 : i32, i32
  }
  func.func @transform_7(%arg0: i32, %arg1: i32) -> (i32, i32, i32) {
    %c0_i32 = arith.constant 0 : i32
    %c0_i32_0 = arith.constant 0 : i32
    return %arg0, %c0_i32, %arg1 : i32, i32, i32
  }
}

</mosaic_0001>

<llo_original>
// kernel: tpu_custom_call.1
$region0: #{tpu_custom_call.1}
  #allocation0 [shape = 'u32[]', space=smem, size = 0x4, offset = 0x4, fixed_abs, tag = 'smem constant byte address 0x4 - core index']
  #allocation1 [shape = 'u32[144,128]{1,0:T(1,128)}', space=vmem, size = 0x12000, scoped, tag = 'internal scratch']
  %s0 = inlined_call_operand.vmem [shape: f32[2,8,128], index: 0, kind: input, shape index: {}]
  %s1 = inlined_call_operand.hbm [shape: f32[2,8,128], index: 1, kind: input, shape index: {}]
  %s2 = inlined_call_operand.hbm [shape: f32[2,8,128], index: 2, kind: input, shape index: {}]
  %s3 = inlined_call_operand.hbm [shape: bf16[3,8,8], index: 3, kind: input, shape index: {}]
  %s4 = inlined_call_operand.vmem [shape: f32[8,1], index: 4, kind: input, shape index: {}]
  %s5 = inlined_call_operand.hbm [shape: bf16[3,8,8], index: 5, kind: input, shape index: {}]
  %s6 = inlined_call_operand.vmem [shape: f32[8,1], index: 6, kind: input, shape index: {}]
  %s7 = inlined_call_operand.hbm [shape: f32[2,8,128], index: 7, kind: output, shape index: {}]
  %s8 = sld [smem:[#allocation0]]
  $region77: #{tpu_custom_call.1} parent=0
    _
  %s10 = ssub.s32 1, %s8
  %s11 = scalar_select 0, %s10, %s8
  $region1: #{tpu_custom_call.1} parent=0
    #allocation2 [shape = 'u8[8192]{0}', space=vmem, size = 0x2000, scoped, tag = 'input window, operand 1']
    #allocation3 [shape = 's32[2]{0}', space=sflag, size = 0x8, scoped, tag = 'scoped memory for tpu_custom_call.1']
    #allocation4 [shape = 's32[2]{0}', space=sflag, size = 0x8, scoped, tag = 'scoped memory for tpu_custom_call.1']
    #allocation5 [shape = 'u8[8192]{0}', space=vmem, size = 0x2000, scoped, tag = 'input window, operand 2']
    #allocation6 [shape = 's32[2]{0}', space=sflag, size = 0x8, scoped, tag = 'scoped memory for tpu_custom_call.1']
    #allocation7 [shape = 'u8[6144]{0}', space=vmem, size = 0x1800, scoped, tag = 'input window, operand 3, single buffered']
    #allocation8 [shape = 'u8[6144]{0}', space=vmem, size = 0x1800, scoped, tag = 'input window, operand 5, single buffered']
    #allocation9 [shape = 's32[1]{0}', space=sflag, size = 0x4, scoped, tag = 'scoped memory for tpu_custom_call.1']
    #allocation10 [shape = 'u8[8192]{0}', space=vmem, size = 0x2000, scoped, tag = 'output window, operand 0']
    %12 = vsyncpa [#allocation3], 0
    %s13 = scalar_lea.sflag [#allocation3], 1
    %14 = vsyncpa %s13, 0
    %15 = vsyncpa [#allocation6], 0
    %s16 = scalar_lea.sflag [#allocation6], 1
    %17 = vsyncpa %s16, 0
    %18 = vsyncpa [#allocation9], 0
    %19 = vsyncpa [#allocation4], 0
    %s20 = scalar_lea.sflag [#allocation4], 1
    %21 = vsyncpa %s20, 0
    loop: start=0, step=1, limit=4
    $region2: #{tpu_custom_call.1} parent=1 // loop_pre_header
      _
    $region3: #{tpu_custom_call.1} parent=1 // loop_header
      %s23 = sphi 0, %s27
      %p24 = scmp.ge.s32.totalorder %s23, 4
      %s30 = sphi 0, %s42
      %s31 = sphi 0, %s38
      %s32 = sphi 0, %s30
      %s33 = sphi 0, %s31
      %s34 = sphi 0, %s32
      %s35 = sphi 0, %s33
      %s53 = sphi 0, %s55
      %s56 = sphi 0, %s53
      %s57 = sphi 0, %s56
      %s73 = sphi 0, %s57
      %s81 = sphi 0, %s83
      %s84 = sphi 0, %s81
      %s85 = sphi 0, %s84
      %s101 = sphi 0, %s85
      %s115 = sphi 0, %s117
      %s118 = sphi 0, %s115
      %s119 = sphi 0, %s118
      %s135 = sphi 0, %s119
      %s139 = sphi 0, %s139
      %s141 = sphi 0, %s139
      %s142 = sphi 0, %s141
      %s156 = sphi 0, %s142
      %s160 = sphi 0, %s160
      %s162 = sphi 0, %s160
      %s163 = sphi 0, %s162
      %s177 = sphi 0, %s163
      %s181 = sphi 0, %s181
      %s183 = sphi 0, %s181
      %s184 = sphi 0, %s183
      %s198 = sphi 0, %s184
      %s202 = sphi 0, %s202
      %s204 = sphi 0, %s202
      %s205 = sphi 0, %s204
      %s219 = sphi 0, %s205
      %s227 = sphi 0, %s229
      %s230 = sphi 0, %s227
      %s231 = sphi 0, %s230
      %s247 = sphi 0, %s231
    $region4: #{tpu_custom_call.1} parent=1 // loop_header_branch
      %26 = sbr.rel (%p24) target = $region8
    $region5: #{tpu_custom_call.1} parent=1 // loop_body
      %s28 = ssub.s32 %s23, 1
      %s29 = ssub.s32 %s23, 2
      %s36 = sadd.s32 1, %s31
      %p37 = scmp.ge.s32.totalorder %s36, 1
      %s38 = scalar_select %p37, 0, %s36
      %s39 = sadd.s32 1, %s30
      %s40 = scalar_select %p37, %s39, %s30
      %p41 = scmp.ge.s32.totalorder %s40, 2
      %s42 = scalar_select %p41, 0, %s40
      %s43 = ssub.s32 %s31, 1
      %p44 = scmp.gt.s32.totalorder %s43, 0
      %s45 = scalar_select %p44, %s43, 0
      %s46 = ssub.s32 %s38, 1
      %p47 = scmp.gt.s32.totalorder %s46, 0
      %s48 = scalar_select %p47, %s46, 0
      %s49 = ssub.s32 %s30, %s42
      %s50 = ssub.s32 %s45, %s48
      %s51 = sor.u32 %s49, %s50
      %p52 = scmp.eq.s32.totalorder %s51, 0
      %s54 = sadd.s32 %s53, 1
      %s55 = scalar_select %p52, %s53, %s54
      %p58 = pneg %p52
      %p59 = scmp.eq.s32.totalorder %s23, 1
      %p60 = por %p58, %p59
      %p61 = scmp.ne.s32.totalorder %s53, %s56
      %p62 = scmp.eq.s32.totalorder %s23, 0
      %p63 = por %p61, %p62
      %p64 = scmp.ne.s32.totalorder %s53, %s56
      %p65 = scmp.eq.s32.totalorder %s28, 1
      %p66 = por %p64, %p65
      %p67 = scmp.ne.s32.totalorder %s56, %s57
      %p68 = scmp.eq.s32.totalorder %s28, 0
      %p69 = por %p67, %p68
      %p70 = scmp.ne.s32.totalorder %s56, %s57
      %p71 = scmp.eq.s32.totalorder %s29, 1
      %p72 = por %p70, %p71
      %p74 = scmp.ne.s32.totalorder %s57, %s73
      %p75 = scmp.eq.s32.totalorder %s29, 0
      %p76 = por %p74, %p75
      %s77 = ssub.s32 %s30, %s42
      %s78 = ssub.s32 %s31, %s38
      %s79 = sor.u32 %s77, %s78
      %p80 = scmp.eq.s32.totalorder %s79, 0
      %s82 = sadd.s32 %s81, 1
      %s83 = scalar_select %p80, %s81, %s82
      %p86 = pneg %p80
      %p87 = scmp.eq.s32.totalorder %s23, 1
      %p88 = por %p86, %p87
      %p89 = scmp.ne.s32.totalorder %s81, %s84
      %p90 = scmp.eq.s32.totalorder %s23, 0
      %p91 = por %p89, %p90
      %p92 = scmp.ne.s32.totalorder %s81, %s84
      %p93 = scmp.eq.s32.totalorder %s28, 1
      %p94 = por %p92, %p93
      %p95 = scmp.ne.s32.totalorder %s84, %s85
      %p96 = scmp.eq.s32.totalorder %s28, 0
      %p97 = por %p95, %p96
      %p98 = scmp.ne.s32.totalorder %s84, %s85
      %p99 = scmp.eq.s32.totalorder %s29, 1
      %p100 = por %p98, %p99
      %p102 = scmp.ne.s32.totalorder %s85, %s101
      %p103 = scmp.eq.s32.totalorder %s29, 0
      %p104 = por %p102, %p103
      %s105 = sadd.s32 %s31, 1
      %p106 = scmp.lt.s32.totalorder %s105, 0
      %s107 = scalar_select %p106, %s105, 0
      %s108 = sadd.s32 %s38, 1
      %p109 = scmp.lt.s32.totalorder %s108, 0
      %s110 = scalar_select %p109, %s108, 0
      %s111 = ssub.s32 %s30, %s42
      %s112 = ssub.s32 %s107, %s110
      %s113 = sor.u32 %s111, %s112
      %p114 = scmp.eq.s32.totalorder %s113, 0
      %s116 = sadd.s32 %s115, 1
      %s117 = scalar_select %p114, %s115, %s116
      %p120 = pneg %p114
      %p121 = scmp.eq.s32.totalorder %s23, 1
      %p122 = por %p120, %p121
      %p123 = scmp.ne.s32.totalorder %s115, %s118
      %p124 = scmp.eq.s32.totalorder %s23, 0
      %p125 = por %p123, %p124
      %p126 = scmp.ne.s32.totalorder %s115, %s118
      %p127 = scmp.eq.s32.totalorder %s28, 1
      %p128 = por %p126, %p127
      %p129 = scmp.ne.s32.totalorder %s118, %s119
      %p130 = scmp.eq.s32.totalorder %s28, 0
      %p131 = por %p129, %p130
      %p132 = scmp.ne.s32.totalorder %s118, %s119
      %p133 = scmp.eq.s32.totalorder %s29, 1
      %p134 = por %p132, %p133
      %p136 = scmp.ne.s32.totalorder %s119, %s135
      %p137 = scmp.eq.s32.totalorder %s29, 0
      %p138 = por %p136, %p137
      %s140 = sadd.s32 %s139, 1
      %p143 = scmp.eq.s32.totalorder %s23, 1
      %p144 = scmp.ne.s32.totalorder %s139, %s141
      %p145 = scmp.eq.s32.totalorder %s23, 0
      %p146 = por %p144, %p145
      %p147 = scmp.ne.s32.totalorder %s139, %s141
      %p148 = scmp.eq.s32.totalorder %s28, 1
      %p149 = por %p147, %p148
      %p150 = scmp.ne.s32.totalorder %s141, %s142
      %p151 = scmp.eq.s32.totalorder %s28, 0
      %p152 = por %p150, %p151
      %p153 = scmp.ne.s32.totalorder %s141, %s142
      %p154 = scmp.eq.s32.totalorder %s29, 1
      %p155 = por %p153, %p154
      %p157 = scmp.ne.s32.totalorder %s142, %s156
      %p158 = scmp.eq.s32.totalorder %s29, 0
      %p159 = por %p157, %p158
      %s161 = sadd.s32 %s160, 1
      %p164 = scmp.eq.s32.totalorder %s23, 1
      %p165 = scmp.ne.s32.totalorder %s160, %s162
      %p166 = scmp.eq.s32.totalorder %s23, 0
      %p167 = por %p165, %p166
      %p168 = scmp.ne.s32.totalorder %s160, %s162
      %p169 = scmp.eq.s32.totalorder %s28, 1
      %p170 = por %p168, %p169
      %p171 = scmp.ne.s32.totalorder %s162, %s163
      %p172 = scmp.eq.s32.totalorder %s28, 0
      %p173 = por %p171, %p172
      %p174 = scmp.ne.s32.totalorder %s162, %s163
      %p175 = scmp.eq.s32.totalorder %s29, 1
      %p176 = por %p174, %p175
      %p178 = scmp.ne.s32.totalorder %s163, %s177
      %p179 = scmp.eq.s32.totalorder %s29, 0
      %p180 = por %p178, %p179
      %s182 = sadd.s32 %s181, 1
      %p185 = scmp.eq.s32.totalorder %s23, 1
      %p186 = scmp.ne.s32.totalorder %s181, %s183
      %p187 = scmp.eq.s32.totalorder %s23, 0
      %p188 = por %p186, %p187
      %p189 = scmp.ne.s32.totalorder %s181, %s183
      %p190 = scmp.eq.s32.totalorder %s28, 1
      %p191 = por %p189, %p190
      %p192 = scmp.ne.s32.totalorder %s183, %s184
      %p193 = scmp.eq.s32.totalorder %s28, 0
      %p194 = por %p192, %p193
      %p195 = scmp.ne.s32.totalorder %s183, %s184
      %p196 = scmp.eq.s32.totalorder %s29, 1
      %p197 = por %p195, %p196
      %p199 = scmp.ne.s32.totalorder %s184, %s198
      %p200 = scmp.eq.s32.totalorder %s29, 0
      %p201 = por %p199, %p200
      %s203 = sadd.s32 %s202, 1
      %p206 = scmp.eq.s32.totalorder %s23, 1
      %p207 = scmp.ne.s32.totalorder %s202, %s204
      %p208 = scmp.eq.s32.totalorder %s23, 0
      %p209 = por %p207, %p208
      %p210 = scmp.ne.s32.totalorder %s202, %s204
      %p211 = scmp.eq.s32.totalorder %s28, 1
      %p212 = por %p210, %p211
      %p213 = scmp.ne.s32.totalorder %s204, %s205
      %p214 = scmp.eq.s32.totalorder %s28, 0
      %p215 = por %p213, %p214
      %p216 = scmp.ne.s32.totalorder %s204, %s205
      %p217 = scmp.eq.s32.totalorder %s29, 1
      %p218 = por %p216, %p217
      %p220 = scmp.ne.s32.totalorder %s205, %s219
      %p221 = scmp.eq.s32.totalorder %s29, 0
      %p222 = por %p220, %p221
      %s223 = ssub.s32 %s30, %s42
      %s224 = ssub.s32 %s31, %s38
      %s225 = sor.u32 %s223, %s224
      %p226 = scmp.eq.s32.totalorder %s225, 0
      %s228 = sadd.s32 %s227, 1
      %s229 = scalar_select %p226, %s227, %s228
      %p232 = pneg %p226
      %p233 = scmp.eq.s32.totalorder %s23, 1
      %p234 = por %p232, %p233
      %p235 = scmp.ne.s32.totalorder %s227, %s230
      %p236 = scmp.eq.s32.totalorder %s23, 0
      %p237 = por %p235, %p236
      %p238 = scmp.ne.s32.totalorder %s227, %s230
      %p239 = scmp.eq.s32.totalorder %s28, 1
      %p240 = por %p238, %p239
      %p241 = scmp.ne.s32.totalorder %s230, %s231
      %p242 = scmp.eq.s32.totalorder %s28, 0
      %p243 = por %p241, %p242
      %p244 = scmp.ne.s32.totalorder %s230, %s231
      %p245 = scmp.eq.s32.totalorder %s29, 1
      %p246 = por %p244, %p245
      %p248 = scmp.ne.s32.totalorder %s231, %s247
      %p249 = scmp.eq.s32.totalorder %s29, 0
      %p250 = por %p248, %p249
      %p251 = scmp.le.s32.totalorder 1, %s23
      %p252 = scmp.lt.s32.totalorder %s23, 3
      %p253 = pnand %p251, %p252
      %p254 = pneg %p253
      // Predicated region
      $region9: #{tpu_custom_call.1} parent=5 // pred_check
        _
      $region10: #{tpu_custom_call.1} parent=5 // pred_check_branch
        %256 = sbr.rel (%p253) target = $region12
      $region11: #{tpu_custom_call.1} parent=5 // pred_region
        %s257 = ssub.s32 %s23, 1
        // Predicated region
        $region13: #{tpu_custom_call.1} parent=11 // pred_check
          %p258 = pneg %p152
        $region14: #{tpu_custom_call.1} parent=11 // pred_check_branch
          %260 = sbr.rel (%p258) target = $region16
        $region15: #{tpu_custom_call.1} parent=11 // pred_region
          %s262 = ssub.s32 192, 192
          %263 = vsyncadd [#allocation6], %s262
          %s264 = sshll.u32 [#allocation7], 4
          %s265 = int_to_ptr.vmem [resolvable:$true] %s264
          %270 = dma.hbm_to_vmem [thread:$0]  %s3, 192, %s265, [#allocation6], 64, 64, 4
        $region16: #{tpu_custom_call.1} parent=11 // pred_fallthru
          _
        // Predicated region
        $region17: #{tpu_custom_call.1} parent=11 // pred_check
          %p271 = pneg %p173
        $region18: #{tpu_custom_call.1} parent=11 // pred_check_branch
          %273 = sbr.rel (%p271) target = $region20
        $region19: #{tpu_custom_call.1} parent=11 // pred_region
          _
        $region20: #{tpu_custom_call.1} parent=11 // pred_fallthru
          _
        // Predicated region
        $region21: #{tpu_custom_call.1} parent=11 // pred_check
          %p274 = pneg %p194
        $region22: #{tpu_custom_call.1} parent=11 // pred_check_branch
          %276 = sbr.rel (%p274) target = $region24
        $region23: #{tpu_custom_call.1} parent=11 // pred_region
          %s278 = ssub.s32 192, 192
          %279 = vsyncadd [#allocation9], %s278
          %s280 = sshll.u32 [#allocation8], 4
          %s281 = int_to_ptr.vmem [resolvable:$true] %s280
          %286 = dma.hbm_to_vmem [thread:$0]  %s5, 192, %s281, [#allocation9], 64, 64, 4
        $region24: #{tpu_custom_call.1} parent=11 // pred_fallthru
          _
        // Predicated region
        $region25: #{tpu_custom_call.1} parent=11 // pred_check
          %p287 = pneg %p215
        $region26: #{tpu_custom_call.1} parent=11 // pred_check_branch
          %289 = sbr.rel (%p287) target = $region28
        $region27: #{tpu_custom_call.1} parent=11 // pred_region
          _
        $region28: #{tpu_custom_call.1} parent=11 // pred_fallthru
          _
      $region12: #{tpu_custom_call.1} parent=5 // pred_fallthru
        _
      %p290 = scmp.lt.s32.totalorder %s23, 2
      // Predicated region
      $region29: #{tpu_custom_call.1} parent=5 // pred_check
        %p291 = pneg %p290
      $region30: #{tpu_custom_call.1} parent=5 // pred_check_branch
        %293 = sbr.rel (%p291) target = $region32
      $region31: #{tpu_custom_call.1} parent=5 // pred_region
        // Predicated region
        $region33: #{tpu_custom_call.1} parent=31 // pred_check
          %p294 = pneg %p63
        $region34: #{tpu_custom_call.1} parent=31 // pred_check_branch
          %296 = sbr.rel (%p294) target = $region36
        $region35: #{tpu_custom_call.1} parent=31 // pred_region
          %s297 = ssub.s32 %s31, 1
          %p298 = scmp.gt.s32.totalorder %s297, 0
          %s299 = scalar_select %p298, %s297, 0
          %p300 = scmp.lt.s32.totalorder %s30, 1
          %s301 = scalar_select %p300, %s30, 1
          %p302 = scmp.lt.s32.totalorder %s299, 0
          %s303 = scalar_select %p302, %s299, 0
          %s304 = sadd.s32 %s303, %s301
          %s305 = smul.addr %s304, 8
          %s306 = scalar_lea.vmem %s0, %s305
          %s307 = ssub.s32 %s31, 1
          %p308 = scmp.gt.s32.totalorder %s307, 0
          %s309 = scalar_select %p308, %s307, 0
        $region36: #{tpu_custom_call.1} parent=31 // pred_fallthru
          _
        // Predicated region
        $region37: #{tpu_custom_call.1} parent=31 // pred_check
          %p310 = pneg %p91
        $region38: #{tpu_custom_call.1} parent=31 // pred_check_branch
          %312 = sbr.rel (%p310) target = $region40
        $region39: #{tpu_custom_call.1} parent=31 // pred_region
          %s313 = sand.u32 %s81, 1
          %s314 = scalar_lea.sflag [#allocation3], %s313
          %s315 = sand.u32 %s81, 1
          %s316 = smul.addr %s315, 8
          %s317 = scalar_lea.vmem [#allocation2], %s316
          %s319 = ssub.s32 128, 128
          %320 = vsyncadd %s314, %s319
          %s321 = sadd.s32 %s31, %s30
          %s322 = smul.addr %s321, 128
          %s323 = scalar_lea.hbm %s1, %s322
          %s325 = sshll.u32 %s317, 4
          %s326 = int_to_ptr.vmem [resolvable:$true] %s325
          %328 = dma.hbm_to_vmem [thread:$0]  %s323, 128, %s326, %s314
        $region40: #{tpu_custom_call.1} parent=31 // pred_fallthru
          _
        // Predicated region
        $region41: #{tpu_custom_call.1} parent=31 // pred_check
          %p329 = pneg %p125
        $region42: #{tpu_custom_call.1} parent=31 // pred_check_branch
          %331 = sbr.rel (%p329) target = $region44
        $region43: #{tpu_custom_call.1} parent=31 // pred_region
          %s332 = sand.u32 %s23, 1
          %s333 = scalar_lea.sflag [#allocation6], %s332
          %s334 = sand.u32 %s115, 1
          %s335 = smul.addr %s334, 8
          %s336 = scalar_lea.vmem [#allocation5], %s335
          %s337 = sadd.s32 %s31, 1
          %p338 = scmp.lt.s32.totalorder %s337, 0
          %s339 = scalar_select %p338, %s337, 0
          %s341 = ssub.s32 128, 128
          %342 = vsyncadd %s333, %s341
          %s343 = sadd.s32 %s339, %s30
          %s344 = smul.addr %s343, 128
          %s345 = scalar_lea.hbm %s2, %s344
          %s347 = sshll.u32 %s336, 4
          %s348 = int_to_ptr.vmem [resolvable:$true] %s347
          %350 = dma.hbm_to_vmem [thread:$0]  %s345, 128, %s348, %s333
        $region44: #{tpu_custom_call.1} parent=31 // pred_fallthru
          _
      $region32: #{tpu_custom_call.1} parent=5 // pred_fallthru
        _
      %p351 = scmp.le.s32.totalorder 1, %s23
      %p352 = scmp.lt.s32.totalorder %s23, 3
      %p353 = pnand %p351, %p352
      %p354 = pneg %p353
      // Predicated region
      $region45: #{tpu_custom_call.1} parent=5 // pred_check
        _
      $region46: #{tpu_custom_call.1} parent=5 // pred_check_branch
        %356 = sbr.rel (%p353) target = $region48
      $region47: #{tpu_custom_call.1} parent=5 // pred_region
        %s357 = ssub.s32 %s23, 1
        %s358 = sand.u32 %s84, 1
        %s359 = scalar_lea.sflag [#allocation3], %s358
        %s360 = sand.u32 %s84, 1
        %s361 = smul.addr %s360, 8
        %s362 = scalar_lea.vmem [#allocation2], %s361
        // Predicated region
        $region49: #{tpu_custom_call.1} parent=47 // pred_check
          %p363 = pneg %p97
        $region50: #{tpu_custom_call.1} parent=47 // pred_check_branch
          %365 = sbr.rel (%p363) target = $region52
        $region51: #{tpu_custom_call.1} parent=47 // pred_region
          %366 = dma.done %s359, 128
        $region52: #{tpu_custom_call.1} parent=47 // pred_fallthru
          _
        %s367 = sand.u32 %s28, 1
        %s368 = scalar_lea.sflag [#allocation6], %s367
        %s369 = sand.u32 %s118, 1
        %s370 = smul.addr %s369, 8
        %s371 = scalar_lea.vmem [#allocation5], %s370
        // Predicated region
        $region53: #{tpu_custom_call.1} parent=47 // pred_check
          %p372 = pneg %p131
        $region54: #{tpu_custom_call.1} parent=47 // pred_check_branch
          %374 = sbr.rel (%p372) target = $region56
        $region55: #{tpu_custom_call.1} parent=47 // pred_region
          %375 = dma.done %s368, 128
        $region56: #{tpu_custom_call.1} parent=47 // pred_fallthru
          _
        // Predicated region
        $region57: #{tpu_custom_call.1} parent=47 // pred_check
          %p376 = pneg %p152
        $region58: #{tpu_custom_call.1} parent=47 // pred_check_branch
          %378 = sbr.rel (%p376) target = $region60
        $region59: #{tpu_custom_call.1} parent=47 // pred_region
          %379 = dma.done [#allocation6], 192
        $region60: #{tpu_custom_call.1} parent=47 // pred_fallthru
          _
        // Predicated region
        $region61: #{tpu_custom_call.1} parent=47 // pred_check
          %p380 = pneg %p194
        $region62: #{tpu_custom_call.1} parent=47 // pred_check_branch
          %382 = sbr.rel (%p380) target = $region64
        $region63: #{tpu_custom_call.1} parent=47 // pred_region
          %383 = dma.done [#allocation9], 192
        $region64: #{tpu_custom_call.1} parent=47 // pred_fallthru
          _
        %s384 = ssub.s32 %s33, 1
        %p385 = scmp.gt.s32.totalorder %s384, 0
        %s386 = scalar_select %p385, %s384, 0
        %p387 = scmp.lt.s32.totalorder %s32, 1
        %s388 = scalar_select %p387, %s32, 1
        %p389 = scmp.lt.s32.totalorder %s386, 0
        %s390 = scalar_select %p389, %s386, 0
        %s391 = sadd.s32 %s390, %s388
        %s392 = smul.addr %s391, 8
        %s393 = scalar_lea.vmem %s0, %s392
        %p394 = pneg %p69
        %p395 = pneg %p66
        %s396 = sand.u32 %s84, 1
        %s397 = scalar_lea.sflag [#allocation3], %s396
        %s398 = sand.u32 %s84, 1
        %s399 = smul.addr %s398, 8
        %s400 = scalar_lea.vmem [#allocation2], %s399
        %p401 = pneg %p97
        %p402 = pneg %p94
        %s403 = sand.u32 %s28, 1
        %s404 = scalar_lea.sflag [#allocation6], %s403
        %s405 = sand.u32 %s118, 1
        %s406 = smul.addr %s405, 8
        %s407 = scalar_lea.vmem [#allocation5], %s406
        %p408 = pneg %p131
        %p409 = pneg %p128
        %p410 = pneg %p152
        %p411 = pneg %p149
        %p412 = pneg %p173
        %p413 = pneg %p170
        %p414 = pneg %p194
        %p415 = pneg %p191
        %p416 = pneg %p215
        %p417 = pneg %p212
        %p418 = pneg %p243
        %p419 = pneg %p240
        %s420 = sand.u32 %s230, 1
        %s421 = scalar_lea.sflag [#allocation4], %s420
        %s422 = sand.u32 %s230, 1
        %s423 = smul.addr %s422, 8
        %s424 = scalar_lea.vmem [#allocation10], %s423
        %s425 = ssub.s32 %s33, 1
        %p426 = scmp.gt.s32.totalorder %s425, 0
        %s427 = scalar_select %p426, %s425, 0
        %p428 = scmp.lt.s32.totalorder %s32, 1
        %s429 = scalar_select %p428, %s32, 1
        %p430 = scmp.lt.s32.totalorder %s427, 0
        %s431 = scalar_select %p430, %s427, 0
        %s432 = sadd.s32 %s431, %s429
        %s433 = smul.addr %s432, 8
        %s434 = scalar_lea.vmem %s0, %s433
        %s435 = ssub.s32 %s33, 1
        %p436 = scmp.gt.s32.totalorder %s435, 0
        %s437 = scalar_select %p436, %s435, 0
        %s438 = sadd.s32 %s33, 1
        %p439 = scmp.lt.s32.totalorder %s438, 0
        %s440 = scalar_select %p439, %s438, 0
        %s442 = smul.u32 %s33, 128
        %v443 = vld [vmem:[%s434] sm:$0xff]
        %v444 = vld [vmem:[%s362] sm:$0xff]
        %v445 = vld [vmem:[%s371] sm:$0xff]
        %v446 = vlaneseq
        %v447 = vand.u32 %v446, 127
        %v448 = vadd.s32 %v447, 128
        %v449 = vadd.s32 %v447, 256
        %s450 = ssub.s32 %s442, 128
        %v451 = vstv %s450
        %v452 = vadd.s32 %v447, %v451
        %v453 = vadd.s32 %v448, %v451
        %v454 = vadd.s32 %v449, %v451
        %vm455 = vcmp.ge.s32.totalorder %v452, 0
        %vm456 = vcmp.ge.s32.totalorder %v453, 0
        %vm457 = vcmp.ge.s32.totalorder %v454, 0
        %vm458 = vcmp.lt.s32.totalorder %v452, 128
        %vm459 = vcmp.lt.s32.totalorder %v453, 128
        %vm460 = vcmp.lt.s32.totalorder %v454, 128
        %vm461 = vmand %vm455, %vm458
        %vm462 = vmand %vm456, %vm459
        %vm463 = vmand %vm457, %vm460
        %v464 = vsel %vm461, %v443, 0.0
        %v465 = vsel %vm462, %v444, 0.0
        %v466 = vsel %vm463, %v445, 0.0
        %vm467 = vcmp.ge.f32.partialorder %v464, 0.0
        %vm468 = vcmp.ge.f32.partialorder %v465, 0.0
        %vm469 = vcmp.ge.f32.partialorder %v466, 0.0
        %v470 = vmul.f32 %v464, 0.1
        %v471 = vmul.f32 %v465, 0.1
        %v472 = vmul.f32 %v466, 0.1
        %v473 = vsel %vm467, %v464, %v470
        %v474 = vsel %vm468, %v465, %v471
        %v475 = vsel %vm469, %v466, %v472
        %v476 = vpack.c.bf16 %v473, %v473
        %v477 = vpack.c.bf16 %v474, %v474
        %v478 = vpack.c.bf16 %v475, %v475
        %v479 = vld [vmem:[#allocation7] sm:$0xf]
        %s480 = scalar_lea.vmem [#allocation7], 4
        %v481 = vld [vmem:[%s480] sm:$0xf]
        %485 = vrot.lane.b32.xlu0 %v476, 3
        %v486 = vpop.permute.xlu0 %485
        %487 = vrot.lane.b32.xlu0 %v477, 3
        %v488 = vpop.permute.xlu0 %487
        %489 = vrot.lane.b32.xlu0 %v478, 3
        %v490 = vpop.permute.xlu0 %489
        %vm491 = vcmask 23552
        %v492 = vsel %vm491, %v486, %v488
        %v493 = vsel %vm491, %v488, %v490
        %vm494 = vcmask 64512
        %v496 = vsel %vm494, %v481, 0
        %vm498 = vcmask 1043456
        %v500 = vsel %vm498, %v492, 0
        %v503 = vsel %vm498, %v493, 0
        %505 = vmatprep.subr.bf16.mxu0 0
        %506 = vmatpush1.bf16.msra.mxu0 0
        %507 = vmatprep.subr.bf16.mxu0 0
        %508 = vmatpush1.bf16.msra.mxu0 0
        %509 = vmatprep.subr.bf16.mxu0 0
        %510 = vmatpush1.bf16.msra.mxu0 0
        %511 = vmatprep.subr.bf16.mxu0 0
        %512 = vmatpush1.bf16.msra.mxu0 0
        %513 = vmatprep.subr.bf16.mxu0 0
        %514 = vmatpush1.bf16.msra.mxu0 0
        %515 = vmatprep.subr.bf16.mxu0 0
        %516 = vmatpush1.bf16.msra.mxu0 0
        %517 = vmatprep.subr.bf16.mxu0 0
        %518 = vmatpush1.bf16.msra.mxu0 0
        %519 = vmatprep.subr.bf16.mxu0 %v503
        %520 = vmatpush1.bf16.msra.mxu0 %v500
        %521 = vmatprep.subr.bf16.mxu0 0
        %522 = vmatpush2.bf16.msra.mxu0 0
        %523 = vmatprep.subr.bf16.mxu0 0
        %524 = vmatpush2.bf16.msra.mxu0 0
        %525 = vmatprep.subr.bf16.mxu0 0
        %526 = vmatpush2.bf16.msra.mxu0 0
        %527 = vmatprep.subr.bf16.mxu0 0
        %528 = vmatpush2.bf16.msra.mxu0 0
        %529 = vmatprep.subr.bf16.mxu0 0
        %530 = vmatpush2.bf16.msra.mxu0 0
        %531 = vmatprep.subr.bf16.mxu0 0
        %532 = vmatpush2.bf16.msra.mxu0 0
        %533 = vmatprep.subr.bf16.mxu0 0
        %534 = vmatpush2.bf16.msra.mxu0 0
        %535 = vmatprep.subr.bf16.mxu0 0
        %536 = vmatpush2.bf16.msra.mxu0 0
        %537 = vmatprep.mubr.bf16.mxu0 0
        %538 = vmatmul.mubr.bf16.gmra.mxu0 %v496
        %v539 = vpop.f32.mrf.mxu0
        %v540 = vadd.f32 0.0, %v539
        %v541 = vpop.f32.mrf.mxu0
        %v542 = vadd.f32 0.0, %v541
        %v543 = vpop.f32.mrf.mxu0
        %v544 = vpop.f32.mrf.mxu0
        %545 = vdwg.mxu0
        %546 = vrot.lane.b32.xlu0 %v476, 4
        %v547 = vpop.permute.xlu0 %546
        %548 = vrot.lane.b32.xlu0 %v477, 4
        %v549 = vpop.permute.xlu0 %548
        %550 = vrot.lane.b32.xlu0 %v478, 4
        %v551 = vpop.permute.xlu0 %550
        %vm552 = vcmask 31744
        %v553 = vsel %vm552, %v547, %v549
        %v554 = vsel %vm552, %v549, %v551
        %v556 = vsel %vm494, %v479, 0
        %v559 = vsel %vm498, %v553, 0
        %v562 = vsel %vm498, %v554, 0
        %564 = vmatprep.subr.bf16.mxu0 0
        %565 = vmatpush1.bf16.msra.mxu0 0
        %566 = vmatprep.subr.bf16.mxu0 0
        %567 = vmatpush1.bf16.msra.mxu0 0
        %568 = vmatprep.subr.bf16.mxu0 0
        %569 = vmatpush1.bf16.msra.mxu0 0
        %570 = vmatprep.subr.bf16.mxu0 0
        %571 = vmatpush1.bf16.msra.mxu0 0
        %572 = vmatprep.subr.bf16.mxu0 0
        %573 = vmatpush1.bf16.msra.mxu0 0
        %574 = vmatprep.subr.bf16.mxu0 0
        %575 = vmatpush1.bf16.msra.mxu0 0
        %576 = vmatprep.subr.bf16.mxu0 0
        %577 = vmatpush1.bf16.msra.mxu0 0
        %578 = vmatprep.subr.bf16.mxu0 %v562
        %579 = vmatpush1.bf16.msra.mxu0 %v559
        %580 = vmatprep.subr.bf16.mxu0 0
        %581 = vmatpush2.bf16.msra.mxu0 0
        %582 = vmatprep.subr.bf16.mxu0 0
        %583 = vmatpush2.bf16.msra.mxu0 0
        %584 = vmatprep.subr.bf16.mxu0 0
        %585 = vmatpush2.bf16.msra.mxu0 0
        %586 = vmatprep.subr.bf16.mxu0 0
        %587 = vmatpush2.bf16.msra.mxu0 0
        %588 = vmatprep.subr.bf16.mxu0 0
        %589 = vmatpush2.bf16.msra.mxu0 0
        %590 = vmatprep.subr.bf16.mxu0 0
        %591 = vmatpush2.bf16.msra.mxu0 0
        %592 = vmatprep.subr.bf16.mxu0 0
        %593 = vmatpush2.bf16.msra.mxu0 0
        %594 = vmatprep.subr.bf16.mxu0 0
        %595 = vmatpush2.bf16.msra.mxu0 0
        %596 = vmatprep.mubr.bf16.mxu0 0
        %597 = vmatmul.mubr.bf16.gmra.mxu0 %v556
        %v598 = vpop.f32.mrf.mxu0
        %v599 = vadd.f32 %v540, %v598
        %v600 = vpop.f32.mrf.mxu0
        %v601 = vadd.f32 %v542, %v600
        %v602 = vpop.f32.mrf.mxu0
        %v603 = vpop.f32.mrf.mxu0
        %604 = vdwg.mxu0
        %s605 = scalar_lea.vmem [#allocation7], 8
        %v606 = vld [vmem:[%s605] sm:$0xf]
        %607 = vrot.lane.b32.xlu0 %v476, 2
        %v608 = vpop.permute.xlu0 %607
        %609 = vrot.lane.b32.xlu0 %v477, 2
        %v610 = vpop.permute.xlu0 %609
        %611 = vrot.lane.b32.xlu0 %v478, 2
        %v612 = vpop.permute.xlu0 %611
        %vm613 = vcmask 15360
        %v614 = vsel %vm613, %v608, %v610
        %v615 = vsel %vm613, %v610, %v612
        %v617 = vsel %vm494, %v606, 0
        %v620 = vsel %vm498, %v614, 0
        %v623 = vsel %vm498, %v615, 0
        %625 = vmatprep.subr.bf16.mxu0 0
        %626 = vmatpush1.bf16.msra.mxu0 0
        %627 = vmatprep.subr.bf16.mxu0 0
        %628 = vmatpush1.bf16.msra.mxu0 0
        %629 = vmatprep.subr.bf16.mxu0 0
        %630 = vmatpush1.bf16.msra.mxu0 0
        %631 = vmatprep.subr.bf16.mxu0 0
        %632 = vmatpush1.bf16.msra.mxu0 0
        %633 = vmatprep.subr.bf16.mxu0 0
        %634 = vmatpush1.bf16.msra.mxu0 0
        %635 = vmatprep.subr.bf16.mxu0 0
        %636 = vmatpush1.bf16.msra.mxu0 0
        %637 = vmatprep.subr.bf16.mxu0 0
        %638 = vmatpush1.bf16.msra.mxu0 0
        %639 = vmatprep.subr.bf16.mxu0 %v623
        %640 = vmatpush1.bf16.msra.mxu0 %v620
        %641 = vmatprep.subr.bf16.mxu0 0
        %642 = vmatpush2.bf16.msra.mxu0 0
        %643 = vmatprep.subr.bf16.mxu0 0
        %644 = vmatpush2.bf16.msra.mxu0 0
        %645 = vmatprep.subr.bf16.mxu0 0
        %646 = vmatpush2.bf16.msra.mxu0 0
        %647 = vmatprep.subr.bf16.mxu0 0
        %648 = vmatpush2.bf16.msra.mxu0 0
        %649 = vmatprep.subr.bf16.mxu0 0
        %650 = vmatpush2.bf16.msra.mxu0 0
        %651 = vmatprep.subr.bf16.mxu0 0
        %652 = vmatpush2.bf16.msra.mxu0 0
        %653 = vmatprep.subr.bf16.mxu0 0
        %654 = vmatpush2.bf16.msra.mxu0 0
        %655 = vmatprep.subr.bf16.mxu0 0
        %656 = vmatpush2.bf16.msra.mxu0 0
        %657 = vmatprep.mubr.bf16.mxu0 0
        %658 = vmatmul.mubr.bf16.gmra.mxu0 %v617
        %v659 = vpop.f32.mrf.mxu0
        %v660 = vadd.f32 0.0, %v659
        %v661 = vpop.f32.mrf.mxu0
        %v662 = vadd.f32 0.0, %v661
        %v663 = vpop.f32.mrf.mxu0
        %v664 = vpop.f32.mrf.mxu0
        %665 = vdwg.mxu0
        %v666 = vadd.f32 %v599, %v660
        %v667 = vadd.f32 %v601, %v662
        %v668 = vld [vmem:[%s4] sm:$0xff]
        %670 = vset.pattern.permute.xlu0 0
        %671 = vperm.xlu0 %670, %v668
        %v672 = vpop.permute.xlu0 %671
        %v674 = vadd.f32 %v666, %v672
        %v675 = vadd.f32 %v667, %v672
        %679 = vrot.lane.b32.xlu0 %v464, 3
        %v680 = vpop.permute.xlu0 %679
        %681 = vrot.lane.b32.xlu0 %v465, 3
        %v682 = vpop.permute.xlu0 %681
        %683 = vrot.lane.b32.xlu0 %v466, 3
        %v684 = vpop.permute.xlu0 %683
        %vm685 = vcmask 23552
        %v686 = vsel %vm685, %v680, %v682
        %v687 = vsel %vm685, %v682, %v684
        %v690 = vadd.f32 %v674, %v686
        %v691 = vadd.f32 %v675, %v687
        %s692 = ssub.s32 %s442, 3
        %v693 = vstv %s692
        %v694 = vadd.s32 %v447, %v693
        %v695 = vadd.s32 %v448, %v693
        %vm696 = vcmp.ge.s32.totalorder %v694, 0
        %vm697 = vcmp.ge.s32.totalorder %v695, 0
        %vm698 = vcmp.lt.s32.totalorder %v694, 128
        %vm699 = vcmp.lt.s32.totalorder %v695, 128
        %vm700 = vmand %vm696, %vm698
        %vm701 = vmand %vm697, %vm699
        %vm702 = vcmp.ge.f32.partialorder %v690, 0.0
        %vm703 = vcmp.ge.f32.partialorder %v691, 0.0
        %v704 = vmul.f32 %v690, 0.1
        %v705 = vmul.f32 %v691, 0.1
        %v706 = vsel %vm702, %v690, %v704
        %v707 = vsel %vm703, %v691, %v705
        %v708 = vsel %vm700, %v706, 0.0
        %v709 = vsel %vm701, %v707, 0.0
        %v710 = vpack.c.bf16 %v708, %v708
        %v711 = vpack.c.bf16 %v709, %v709
        %v712 = vld [vmem:[#allocation8] sm:$0xf]
        %s713 = scalar_lea.vmem [#allocation8], 4
        %v714 = vld [vmem:[%s713] sm:$0xf]
        %717 = vrot.lane.b32.xlu0 %v710, 125
        %v718 = vpop.permute.xlu0 %717
        %719 = vrot.lane.b32.xlu0 %v711, 125
        %v720 = vpop.permute.xlu0 %719
        %vm721 = vcmask 1022976
        %v722 = vsel %vm721, %v718, %v720
        %v724 = vsel %vm494, %v714, 0
        %v727 = vsel %vm498, %v722, 0
        %729 = vmatprep.subr.bf16.mxu0 0
        %730 = vmatpush1.bf16.msra.mxu0 0
        %731 = vmatprep.subr.bf16.mxu0 0
        %732 = vmatpush1.bf16.msra.mxu0 0
        %733 = vmatprep.subr.bf16.mxu0 0
        %734 = vmatpush1.bf16.msra.mxu0 0
        %735 = vmatprep.subr.bf16.mxu0 0
        %736 = vmatpush1.bf16.msra.mxu0 0
        %737 = vmatprep.subr.bf16.mxu0 0
        %738 = vmatpush1.bf16.msra.mxu0 0
        %739 = vmatprep.subr.bf16.mxu0 0
        %740 = vmatpush1.bf16.msra.mxu0 0
        %741 = vmatprep.subr.bf16.mxu0 0
        %742 = vmatpush1.bf16.msra.mxu0 0
        %743 = vmatprep.subr.bf16.mxu0 0
        %744 = vmatpush1.bf16.msra.mxu0 %v727
        %745 = vmatprep.subr.bf16.mxu0 0
        %746 = vmatpush2.bf16.msra.mxu0 0
        %747 = vmatprep.subr.bf16.mxu0 0
        %748 = vmatpush2.bf16.msra.mxu0 0
        %749 = vmatprep.subr.bf16.mxu0 0
        %750 = vmatpush2.bf16.msra.mxu0 0
        %751 = vmatprep.subr.bf16.mxu0 0
        %752 = vmatpush2.bf16.msra.mxu0 0
        %753 = vmatprep.subr.bf16.mxu0 0
        %754 = vmatpush2.bf16.msra.mxu0 0
        %755 = vmatprep.subr.bf16.mxu0 0
        %756 = vmatpush2.bf16.msra.mxu0 0
        %757 = vmatprep.subr.bf16.mxu0 0
        %758 = vmatpush2.bf16.msra.mxu0 0
        %759 = vmatprep.subr.bf16.mxu0 0
        %760 = vmatpush2.bf16.msra.mxu0 0
        %761 = vmatprep.mubr.bf16.mxu0 0
        %762 = vmatmul.mubr.bf16.gmra.mxu0 %v724
        %v763 = vpop.f32.mrf.mxu0
        %v764 = vadd.f32 0.0, %v763
        %v765 = vpop.f32.mrf.mxu0
        %v766 = vpop.f32.mrf.mxu0
        %v767 = vpop.f32.mrf.mxu0
        %768 = vdwg.mxu0
        %v770 = vsel %vm494, %v712, 0
        %v773 = vsel %vm498, %v710, 0
        %775 = vmatprep.subr.bf16.mxu0 0
        %776 = vmatpush1.bf16.msra.mxu0 0
        %777 = vmatprep.subr.bf16.mxu0 0
        %778 = vmatpush1.bf16.msra.mxu0 0
        %779 = vmatprep.subr.bf16.mxu0 0
        %780 = vmatpush1.bf16.msra.mxu0 0
        %781 = vmatprep.subr.bf16.mxu0 0
        %782 = vmatpush1.bf16.msra.mxu0 0
        %783 = vmatprep.subr.bf16.mxu0 0
        %784 = vmatpush1.bf16.msra.mxu0 0
        %785 = vmatprep.subr.bf16.mxu0 0
        %786 = vmatpush1.bf16.msra.mxu0 0
        %787 = vmatprep.subr.bf16.mxu0 0
        %788 = vmatpush1.bf16.msra.mxu0 0
        %789 = vmatprep.subr.bf16.mxu0 0
        %790 = vmatpush1.bf16.msra.mxu0 %v773
        %791 = vmatprep.subr.bf16.mxu0 0
        %792 = vmatpush2.bf16.msra.mxu0 0
        %793 = vmatprep.subr.bf16.mxu0 0
        %794 = vmatpush2.bf16.msra.mxu0 0
        %795 = vmatprep.subr.bf16.mxu0 0
        %796 = vmatpush2.bf16.msra.mxu0 0
        %797 = vmatprep.subr.bf16.mxu0 0
        %798 = vmatpush2.bf16.msra.mxu0 0
        %799 = vmatprep.subr.bf16.mxu0 0
        %800 = vmatpush2.bf16.msra.mxu0 0
        %801 = vmatprep.subr.bf16.mxu0 0
        %802 = vmatpush2.bf16.msra.mxu0 0
        %803 = vmatprep.subr.bf16.mxu0 0
        %804 = vmatpush2.bf16.msra.mxu0 0
        %805 = vmatprep.subr.bf16.mxu0 0
        %806 = vmatpush2.bf16.msra.mxu0 0
        %807 = vmatprep.mubr.bf16.mxu0 0
        %808 = vmatmul.mubr.bf16.gmra.mxu0 %v770
        %v809 = vpop.f32.mrf.mxu0
        %v810 = vadd.f32 %v764, %v809
        %v811 = vpop.f32.mrf.mxu0
        %v812 = vpop.f32.mrf.mxu0
        %v813 = vpop.f32.mrf.mxu0
        %814 = vdwg.mxu0
        %s815 = scalar_lea.vmem [#allocation8], 8
        %v816 = vld [vmem:[%s815] sm:$0xf]
        %817 = vrot.lane.b32.xlu0 %v710, 122
        %v818 = vpop.permute.xlu0 %817
        %819 = vrot.lane.b32.xlu0 %v711, 122
        %v820 = vpop.permute.xlu0 %819
        %vm821 = vcmask 998400
        %v822 = vsel %vm821, %v818, %v820
        %v824 = vsel %vm494, %v816, 0
        %v827 = vsel %vm498, %v822, 0
        %829 = vmatprep.subr.bf16.mxu0 0
        %830 = vmatpush1.bf16.msra.mxu0 0
        %831 = vmatprep.subr.bf16.mxu0 0
        %832 = vmatpush1.bf16.msra.mxu0 0
        %833 = vmatprep.subr.bf16.mxu0 0
        %834 = vmatpush1.bf16.msra.mxu0 0
        %835 = vmatprep.subr.bf16.mxu0 0
        %836 = vmatpush1.bf16.msra.mxu0 0
        %837 = vmatprep.subr.bf16.mxu0 0
        %838 = vmatpush1.bf16.msra.mxu0 0
        %839 = vmatprep.subr.bf16.mxu0 0
        %840 = vmatpush1.bf16.msra.mxu0 0
        %841 = vmatprep.subr.bf16.mxu0 0
        %842 = vmatpush1.bf16.msra.mxu0 0
        %843 = vmatprep.subr.bf16.mxu0 0
        %844 = vmatpush1.bf16.msra.mxu0 %v827
        %845 = vmatprep.subr.bf16.mxu0 0
        %846 = vmatpush2.bf16.msra.mxu0 0
        %847 = vmatprep.subr.bf16.mxu0 0
        %848 = vmatpush2.bf16.msra.mxu0 0
        %849 = vmatprep.subr.bf16.mxu0 0
        %850 = vmatpush2.bf16.msra.mxu0 0
        %851 = vmatprep.subr.bf16.mxu0 0
        %852 = vmatpush2.bf16.msra.mxu0 0
        %853 = vmatprep.subr.bf16.mxu0 0
        %854 = vmatpush2.bf16.msra.mxu0 0
        %855 = vmatprep.subr.bf16.mxu0 0
        %856 = vmatpush2.bf16.msra.mxu0 0
        %857 = vmatprep.subr.bf16.mxu0 0
        %858 = vmatpush2.bf16.msra.mxu0 0
        %859 = vmatprep.subr.bf16.mxu0 0
        %860 = vmatpush2.bf16.msra.mxu0 0
        %861 = vmatprep.mubr.bf16.mxu0 0
        %862 = vmatmul.mubr.bf16.gmra.mxu0 %v824
        %v863 = vpop.f32.mrf.mxu0
        %v864 = vadd.f32 0.0, %v863
        %v865 = vpop.f32.mrf.mxu0
        %v866 = vpop.f32.mrf.mxu0
        %v867 = vpop.f32.mrf.mxu0
        %868 = vdwg.mxu0
        %v869 = vadd.f32 %v810, %v864
        %v870 = vld [vmem:[%s6] sm:$0xff]
        %872 = vset.pattern.permute.xlu0 0
        %873 = vperm.xlu0 %872, %v870
        %v874 = vpop.permute.xlu0 %873
        %v876 = vadd.f32 %v869, %v874
        %879 = vrot.lane.b32.xlu0 %v690, 125
        %v880 = vpop.permute.xlu0 %879
        %881 = vrot.lane.b32.xlu0 %v691, 125
        %v882 = vpop.permute.xlu0 %881
        %vm883 = vcmask 1022976
        %v884 = vsel %vm883, %v880, %v882
        %v886 = vadd.f32 %v876, %v884
        %887 = vst [vmem:[%s424] sm:$0xff] %v886
        %s888 = sand.u32 %s230, 1
        %s889 = scalar_lea.sflag [#allocation4], %s888
        %s890 = sand.u32 %s230, 1
        %s891 = smul.addr %s890, 8
        %s892 = scalar_lea.vmem [#allocation10], %s891
        // Predicated region
        $region65: #{tpu_custom_call.1} parent=47 // pred_check
          %p893 = pneg %p240
        $region66: #{tpu_custom_call.1} parent=47 // pred_check_branch
          %895 = sbr.rel (%p893) target = $region68
        $region67: #{tpu_custom_call.1} parent=47 // pred_region
          %s897 = ssub.s32 128, 128
          %898 = vsyncadd %s889, %s897
          %s899 = sadd.s32 %s33, %s32
          %s900 = smul.addr %s899, 128
          %s901 = scalar_lea.hbm %s7, %s900
          %s903 = sshll.u32 %s892, 4
          %s904 = int_to_ptr.vmem [resolvable:$true] %s903
          %906 = dma.vmem_to_hbm [thread:$0]  %s904, 128, %s901, %s889
        $region68: #{tpu_custom_call.1} parent=47 // pred_fallthru
          _
      $region48: #{tpu_custom_call.1} parent=5 // pred_fallthru
        _
      %p907 = scmp.le.s32.totalorder 2, %s23
      // Predicated region
      $region69: #{tpu_custom_call.1} parent=5 // pred_check
        %p908 = pneg %p907
      $region70: #{tpu_custom_call.1} parent=5 // pred_check_branch
        %910 = sbr.rel (%p908) target = $region72
      $region71: #{tpu_custom_call.1} parent=5 // pred_region
        %s911 = ssub.s32 %s23, 2
        // Predicated region
        $region73: #{tpu_custom_call.1} parent=71 // pred_check
          %p912 = pneg %p246
        $region74: #{tpu_custom_call.1} parent=71 // pred_check_branch
          %914 = sbr.rel (%p912) target = $region76
        $region75: #{tpu_custom_call.1} parent=71 // pred_region
          %s915 = sand.u32 %s231, 1
          %s916 = scalar_lea.sflag [#allocation4], %s915
          %s917 = sand.u32 %s231, 1
          %s918 = smul.addr %s917, 8
          %s919 = scalar_lea.vmem [#allocation10], %s918
          %920 = dma.done %s916, 128
        $region76: #{tpu_custom_call.1} parent=71 // pred_fallthru
          _
      $region72: #{tpu_custom_call.1} parent=5 // pred_fallthru
        _
    $region6: #{tpu_custom_call.1} parent=1 // loop_footer
      %s27 = sadd.s32 1, %s23
    $region7: #{tpu_custom_call.1} parent=1 // loop_footer_branch
      %22 = sbr.rel target = $region3
    $region8: #{tpu_custom_call.1} parent=1 // loop_exit
      _
    %921 = vsyncpa [#allocation3], 1
    %s922 = scalar_lea.sflag [#allocation3], 1
    %923 = vsyncpa %s922, 1
    %924 = vsyncpa [#allocation6], 1
    %s925 = scalar_lea.sflag [#allocation6], 1
    %926 = vsyncpa %s925, 1
    %927 = vsyncpa [#allocation9], 1
    %928 = vsyncpa [#allocation4], 1
    %s929 = scalar_lea.sflag [#allocation4], 1
    %930 = vsyncpa %s929, 1

</llo_original>
